<compile_context>
chip_gen: v6e
topology: v6e:2x2x1
jax: 0.10.0
libtpu: 0.0.40
codegen_flags: <defaults>
</compile_context>

<pallas_src>
import functools

import jax
import jax.numpy as jnp
from jax.experimental import pallas as pl
from jax.experimental.pallas import tpu as pltpu

_LANES = 128
_TARGET_TILE_BYTES = 8 * 1024 * 1024   # ~8 MiB per tile (in+out dbl-buf ~32 MiB)
_VMEM_LIMIT_BYTES = 48 * 1024 * 1024   # < v7x 64 MiB physical, << v5e/v6e 128 MiB


def _sublane_multiple(dtype) -> int:
    # f32 -> 8, bf16/f16 -> 16, int8/fp8 -> 32 (packed-dtype block minimum).
    itemsize = jnp.dtype(dtype).itemsize
    return max(8, 32 // itemsize)


def _apply_non_lin(x, non_lin, negative_slope):
    """Same math used inside the kernel and for the tiny misaligned tail."""
    if non_lin == "ReLU":
        return jnp.maximum(x, jnp.zeros_like(x))
    if non_lin == "LeakyReLU":
        return jnp.where(x > 0, x, x * jnp.asarray(negative_slope, x.dtype))
    if non_lin == "tanh":
        # jnp.tanh lowers to the hardware EUP tanh (no exp/recip expansion),
        # so even v5e's single EUP keeps this HBM-bound.
        return jnp.tanh(x)
    raise ValueError(f"unsupported non_lin: {non_lin}")


def _non_lin_kernel(x_ref, o_ref, *, non_lin, negative_slope):
    o_ref[...] = _apply_non_lin(x_ref[...], non_lin, negative_slope)


def non_lin_pallas(x, non_lin="ReLU", negative_slope=0.01, *,
                   donate_input=False, tile_rows_hint=None):
    """Elementwise nonlinearity over an arbitrarily shaped array via Pallas."""
    orig_shape = x.shape
    dtype = x.dtype
    total = x.size
    if total == 0:
        return x
    itemsize = jnp.dtype(dtype).itemsize
    sub = _sublane_multiple(dtype)

    flat = jnp.reshape(x, (-1,))
    main = (total // _LANES) * _LANES   # 128-aligned prefix handled in-kernel

    if main == 0:
        # Tiny array (<128 elems): a kernel launch is pure overhead.
        return jnp.reshape(_apply_non_lin(flat, non_lin, negative_slope), orig_shape)

    rows = main // _LANES
    slab = jnp.reshape(flat if main == total else flat[:main], (rows, _LANES))

    # Tile rows: multiple of the sublane quantum (block_shape rule), capped at
    # ~8 MiB; if the whole slab is smaller, one block equal to the full array
    # dims is always legal regardless of divisibility.
    if tile_rows_hint is None:
        target_rows = max(sub, (_TARGET_TILE_BYTES // (_LANES * itemsize)) // sub * sub)
    else:
        target_rows = max(sub, (int(tile_rows_hint) // sub) * sub)
    block_rows = target_rows if rows > target_rows else rows
    grid = (pl.cdiv(rows, block_rows),)   # last block may be partial (clipped)

    kernel = functools.partial(
        _non_lin_kernel, non_lin=non_lin, negative_slope=negative_slope)

    elems = rows * _LANES
    cost = pl.CostEstimate(
        flops=int(elems),
        transcendentals=int(elems) if non_lin == "tanh" else 0,
        bytes_accessed=int(2 * elems * itemsize))

    out_slab = pl.pallas_call(
        kernel,
        out_shape=jax.ShapeDtypeStruct((rows, _LANES), dtype),
        grid_spec=pltpu.PrefetchScalarGridSpec(
            num_scalar_prefetch=0,
            grid=grid,
            in_specs=[pl.BlockSpec((block_rows, _LANES), lambda i: (i, 0))],
            out_specs=pl.BlockSpec((block_rows, _LANES), lambda i: (i, 0)),
        ),
        compiler_params=pltpu.CompilerParams(
            dimension_semantics=("parallel",),
            vmem_limit_bytes=_VMEM_LIMIT_BYTES,
        ),
        cost_estimate=cost,
        input_output_aliases=({0: 0} if donate_input else {}),
    )(slab)

    out_flat = jnp.reshape(out_slab, (-1,))
    if main != total:
        # <128-element remainder: plain jnp, negligible traffic, no pad/slice
        # of the full array.
        tail = _apply_non_lin(flat[main:], non_lin, negative_slope)
        out_flat = jnp.concatenate([out_flat, tail])
    return jnp.reshape(out_flat, orig_shape)


def _reference(x, non_lin, negative_slope=0.01):
    return _apply_non_lin(x, non_lin, negative_slope)


def _check(out, ref, x, atol, rtol):
    if out.shape != x.shape or out.dtype != x.dtype:
        return False
    return bool(jnp.allclose(out.astype(jnp.float32), ref.astype(jnp.float32),
                             atol=atol, rtol=rtol))


if __name__ == "__main__":
    key = jax.random.PRNGKey(0)
    ok = True
    non_lins = ("ReLU", "LeakyReLU", "tanh")

    # Typical NCHW activation, f32 (aligned zero-copy path, single block).
    x_f32 = jax.random.normal(key, (2, 4, 16, 16), dtype=jnp.float32)
    for nl in non_lins:
        out = jax.block_until_ready(non_lin_pallas(x_f32, non_lin=nl))
        ok &= _check(out, _reference(x_f32, nl), x_f32, 1e-6, 1e-6)

    # bf16 input (aligned path; no sublane-rounding pad anymore).
    x_bf16 = jax.random.normal(key, (2, 4, 16, 16), dtype=jnp.bfloat16)
    for nl in non_lins:
        out = jax.block_until_ready(non_lin_pallas(x_bf16, non_lin=nl))
        ok &= _check(out, _reference(x_bf16, nl), x_bf16, 1e-2, 1e-2)

    # bf16 with rows % 16 != 0 but total % 128 == 0: previously padded, now
    # reshape-only zero-copy (block equals full array dims).
    x_bf16_odd_rows = jax.random.normal(key, (3, 3, 128), dtype=jnp.bfloat16)
    out = jax.block_until_ready(non_lin_pallas(x_bf16_odd_rows, non_lin="LeakyReLU"))
    ok &= _check(out, _reference(x_bf16_odd_rows, "LeakyReLU"), x_bf16_odd_rows, 1e-2, 1e-2)

    # Lane-misaligned size: 128-aligned prefix in-kernel + jnp tail.
    x_odd = jax.random.normal(key, (3, 5, 7, 11), dtype=jnp.float32)
    for nl in non_lins:
        out = jax.block_until_ready(non_lin_pallas(x_odd, non_lin=nl))
        ok &= _check(out, _reference(x_odd, nl), x_odd, 1e-6, 1e-6)

    # Multi-block grid with a clipped partial last block (tile override keeps
    # the test small while exercising the production tiling path).
    x_grid = jax.random.normal(key, (35, 128), dtype=jnp.float32)
    out = jax.block_until_ready(
        non_lin_pallas(x_grid, non_lin="ReLU", tile_rows_hint=16))
    ok &= _check(out, _reference(x_grid, "ReLU"), x_grid, 1e-6, 1e-6)

    # Tiny (<128 elems) pure-jnp fallback.
    x_tiny = jax.random.normal(key, (5, 7), dtype=jnp.float32)
    out = jax.block_until_ready(non_lin_pallas(x_tiny, non_lin="tanh"))
    ok &= _check(out, _reference(x_tiny, "tanh"), x_tiny, 1e-6, 1e-6)

    # Optional in-place aliasing path.
    out = jax.block_until_ready(
        non_lin_pallas(x_f32, non_lin="ReLU", donate_input=True))
    ok &= _check(out, _reference(x_f32, "ReLU"), x_f32, 1e-6, 1e-6)

    print("KERNEL_OK" if ok else "KERNEL_MISMATCH")
</pallas_src>

<mosaic_0001>
module attributes {stable_mosaic.version = 11 : i64} {
  func.func @_non_lin_kernel(%arg0: i32, %arg1: memref<16x128xf32, #tpu.memory_space<vmem>>, %arg2: memref<16x128xf32, #tpu.memory_space<vmem>>) attributes {dimension_semantics = [#tpu.dimension_semantics<parallel>], iteration_bounds = array<i64: 1>, scalar_prefetch = 0 : i64, scratch_operands = 0 : i64, tpu.core_type = #tpu.core_type<tc>, window_params = [{transform_indices = @transform_0, window_bounds = array<i64: 16, 128>}, {transform_indices = @transform_1, window_bounds = array<i64: 16, 128>}]} {
    %c0 = arith.constant 0 : index
    %c0_0 = arith.constant 0 : index
    %0 = vector.load %arg1[%c0, %c0_0] : memref<16x128xf32, #tpu.memory_space<vmem>>, vector<16x128xf32>
    %cst = arith.constant 0.000000e+00 : f32
    %1 = vector.broadcast %cst : f32 to vector<16x128xf32>
    %2 = arith.maximumf %0, %1 : vector<16x128xf32>
    %c0_1 = arith.constant 0 : index
    %c0_2 = arith.constant 0 : index
    %3 = vector.load %arg2[%c0_1, %c0_2] : memref<16x128xf32, #tpu.memory_space<vmem>>, vector<16x128xf32>
    tpu.vector_store %arg2[%c0_1, %c0_2], %2 {strides = array<i32>} : memref<16x128xf32, #tpu.memory_space<vmem>>, vector<16x128xf32>,
    return
  }
  func.func @transform_0(%arg0: i32) -> (i32, i32) {
    %c0_i32 = arith.constant 0 : i32
    %c0_i32_0 = arith.constant 0 : i32
    return %arg0, %c0_i32 : i32, i32
  }
  func.func @transform_1(%arg0: i32) -> (i32, i32) {
    %c0_i32 = arith.constant 0 : i32
    %c0_i32_0 = arith.constant 0 : i32
    return %arg0, %c0_i32 : i32, i32
  }
}

</mosaic_0001>

<llo_original>
// kernel: tpu_custom_call.1
$region0: #{tpu_custom_call.1}
  #allocation0 [shape = 'u32[]', space=smem, size = 0x4, offset = 0x4, fixed_abs, tag = 'smem constant byte address 0x4 - core index']
  #allocation1 [shape = 'u32[144,128]{1,0:T(1,128)}', space=vmem, size = 0x12000, scoped, tag = 'internal scratch']
  %s0 = inlined_call_operand.hbm [shape: f32[16,128], index: 0, kind: input, shape index: {}]
  %s1 = inlined_call_operand.hbm [shape: f32[16,128], index: 1, kind: output, shape index: {}]
  %s2 = sld [smem:[#allocation0]]
  $region18: #{tpu_custom_call.1} parent=0
    _
  %s4 = ssub.s32 1, %s2
  %s5 = scalar_select 0, %s4, %s2
  $region1: #{tpu_custom_call.1} parent=0
    #allocation2 [shape = 'u8[8192]{0}', space=vmem, size = 0x2000, scoped, tag = 'input window, operand 0, single buffered']
    #allocation3 [shape = 's32[1]{0}', space=sflag, size = 0x4, scoped, tag = 'scoped memory for tpu_custom_call.1']
    #allocation4 [shape = 's32[1]{0}', space=sflag, size = 0x4, scoped, tag = 'scoped memory for tpu_custom_call.1']
    #allocation5 [shape = 'u8[8192]{0}', space=vmem, size = 0x2000, scoped, tag = 'output window, operand 0, single buffered']
    %6 = vsyncpa [#allocation3], 0
    %7 = vsyncpa [#allocation4], 0
    // Predicated region
    $region2: #{tpu_custom_call.1} parent=1 // pred_check
      _
    $region3: #{tpu_custom_call.1} parent=1 // pred_check_branch
      %9 = sbr.rel (0) target = $region5
    $region4: #{tpu_custom_call.1} parent=1 // pred_region
      %s11 = ssub.s32 256, 256
      %12 = vsyncadd [#allocation3], %s11
      %s13 = sshll.u32 [#allocation2], 4
      %s14 = int_to_ptr.vmem [resolvable:$true] %s13
      %19 = dma.hbm_to_vmem [thread:$0]  %s0, 256, %s14, [#allocation3], 128, 128, 8
    $region5: #{tpu_custom_call.1} parent=1 // pred_fallthru
      _
    // Predicated region
    $region6: #{tpu_custom_call.1} parent=1 // pred_check
      _
    $region7: #{tpu_custom_call.1} parent=1 // pred_check_branch
      %21 = sbr.rel (0) target = $region9
    $region8: #{tpu_custom_call.1} parent=1 // pred_region
      %22 = dma.done [#allocation3], 256
    $region9: #{tpu_custom_call.1} parent=1 // pred_fallthru
      _
    %v23 = vld [vmem:[#allocation2] sm:$0xff]
    %v24 = vld [vmem:[#allocation2 + $0x8] sm:$0xff]
    %v25 = vmax.f32 %v23, 0.0
    %v26 = vmax.f32 %v24, 0.0
    %27 = vst [vmem:[#allocation5] sm:$0xff] %v25
    %28 = vst [vmem:[#allocation5 + $0x8] sm:$0xff] %v26
    // Predicated region
    $region10: #{tpu_custom_call.1} parent=1 // pred_check
      _
    $region11: #{tpu_custom_call.1} parent=1 // pred_check_branch
      %30 = sbr.rel (0) target = $region13
    $region12: #{tpu_custom_call.1} parent=1 // pred_region
      %s32 = ssub.s32 256, 256
      %33 = vsyncadd [#allocation4], %s32
      %s34 = sshll.u32 [#allocation5], 4
      %s35 = int_to_ptr.vmem [resolvable:$true] %s34
      %40 = dma.vmem_to_hbm [thread:$0]  %s35, 256, %s1, [#allocation4], 128, 128, 8
    $region13: #{tpu_custom_call.1} parent=1 // pred_fallthru
      _
    // Predicated region
    $region14: #{tpu_custom_call.1} parent=1 // pred_check
      _
    $region15: #{tpu_custom_call.1} parent=1 // pred_check_branch
      %42 = sbr.rel (0) target = $region17
    $region16: #{tpu_custom_call.1} parent=1 // pred_region
      %43 = dma.done [#allocation4], 256
    $region17: #{tpu_custom_call.1} parent=1 // pred_fallthru
      _
    %44 = vsyncpa [#allocation3], 1
    %45 = vsyncpa [#allocation4], 1

</llo_original>
